<compile_context>
chip_gen: v5e
topology: v5e:2x2
jax: 0.10.0
libtpu: 0.0.40
codegen_flags: <defaults>
</compile_context>

<pallas_src>
import functools

import jax
import jax.numpy as jnp
from jax.experimental import pallas as pl
from jax.experimental.pallas import tpu as pltpu


def agv_kernel(audio_ref, video_ref,
               wa_ref, ba_ref,    # W_audio.T (H,H) bf16, b_audio (1,H) f32
               wv_ref, bv_ref,    # W_video.T (H,H) bf16, b_video (1,H) f32
               wg_ref, wvv_ref,   # W_g.T, W_v.T (H,H) bf16
               wh_ref,            # W_h.T (H,H) bf16
               o_ref):
    a = audio_ref[...]                       # bf16 (cast in the wrapper)
    v = video_ref[...]                       # f32  (kept for alpha * V)
    v_bf = v.astype(jnp.bfloat16)

    # a_t = relu(audio @ Wa.T + b_a), v_t = relu(video @ Wvid.T + b_v)
    a_t = jnp.maximum(
        jnp.dot(a, wa_ref[...], preferred_element_type=jnp.float32) + ba_ref[...],
        0.0)
    v_t = jnp.maximum(
        jnp.dot(v_bf, wv_ref[...], preferred_element_type=jnp.float32) + bv_ref[...],
        0.0)

    # content_v = affine_v(v_t) + affine_g(a_t)  (two K=H matmuls, f32 accum)
    content_v = (
        jnp.dot(v_t.astype(jnp.bfloat16), wvv_ref[...],
                preferred_element_type=jnp.float32)
        + jnp.dot(a_t.astype(jnp.bfloat16), wg_ref[...],
                  preferred_element_type=jnp.float32))

    # z_t = affine_h(tanh(content_v))
    z_t = jnp.dot(jnp.tanh(content_v).astype(jnp.bfloat16), wh_ref[...],
                  preferred_element_type=jnp.float32)

    # alpha_t = softmax(z_t, dim=-1); max-subtraction keeps exp() <= 1 so even
    # garbage rows of a ragged final tile cannot overflow (they are dropped by
    # the clamped output writeback anyway).
    z_max = jnp.max(z_t, axis=-1, keepdims=True)
    e = jnp.exp(z_t - z_max)
    denom = jnp.sum(e, axis=-1, keepdims=True)
    alpha = e * pl.reciprocal(denom, approx=True)   # EUP slot; ~1e-3 rel. err

    # video_t = alpha_t * V
    o_ref[...] = (alpha * v).astype(o_ref.dtype)


def prepare_params(params, compute_dtype=jnp.bfloat16):
    """One-time weight prep (transpose + cast). Call once, NOT per step."""
    return {
        "wa": params["W_audio"].T.astype(compute_dtype),
        "ba": params["b_audio"].reshape(1, -1).astype(jnp.float32),
        "wv": params["W_video"].T.astype(compute_dtype),
        "bv": params["b_video"].reshape(1, -1).astype(jnp.float32),
        "wg": params["W_g"].T.astype(compute_dtype),
        "wvv": params["W_v"].T.astype(compute_dtype),
        "wh": params["W_h"].T.astype(compute_dtype),
    }


@functools.partial(jax.jit, static_argnames=("tm",))
def agv_forward(audio, video, prep, tm=1024):
    """audio, video: (B, T, H) f32. prep: output of prepare_params. Returns (B, T, H)."""
    B, T, H = video.shape
    M = B * T

    # Audio only feeds the MXU -> bf16 in HBM is free bandwidth (25% of input
    # traffic). Video stays f32 for the exact alpha * V product and f32 output.
    a2 = audio.reshape(M, H).astype(jnp.bfloat16)
    v2 = video.reshape(M, H)

    # Large row tile to amortize per-step overhead; cap for tiny inputs so we
    # don't process a mostly-garbage tile. No padding / slicing copies: the
    # grid is cdiv(M, tm) and the last block may be ragged.
    tm_eff = min(tm, ((M + 7) // 8) * 8)
    num_tiles = pl.cdiv(M, tm_eff)

    row_spec = pl.BlockSpec((tm_eff, H), lambda i: (i, 0))
    full = lambda shape: pl.BlockSpec(shape, lambda i: (0, 0))

    out = pl.pallas_call(
        agv_kernel,
        out_shape=jax.ShapeDtypeStruct((M, H), video.dtype),
        grid=(num_tiles,),
        in_specs=[row_spec, row_spec,
                  full((H, H)), full((1, H)),
                  full((H, H)), full((1, H)),
                  full((H, H)), full((H, H)), full((H, H))],
        out_specs=row_spec,
        compiler_params=pltpu.CompilerParams(
            dimension_semantics=("parallel",),
            # ~8 MiB needed at tm=1024; 32 MiB clears v5e's 16 MiB default
            # scoped limit while staying within v7x's 64 MiB physical VMEM.
            vmem_limit_bytes=32 * 1024 * 1024),
    )(a2, v2, prep["wa"], prep["ba"], prep["wv"], prep["bv"],
      prep["wg"], prep["wvv"], prep["wh"])

    return out.reshape(B, T, H)


def xavier_uniform(key, shape, dtype=jnp.float32):
    fan_out, fan_in = shape
    limit = jnp.sqrt(6.0 / (fan_in + fan_out))
    return jax.random.uniform(key, shape, dtype, minval=-limit, maxval=limit)


def init_params(key, hidden=128):
    ks = jax.random.split(key, 7)
    bound = 1.0 / jnp.sqrt(hidden)  # PyTorch Linear default bias init
    return {
        "W_audio": xavier_uniform(ks[0], (hidden, hidden)),
        "b_audio": jax.random.uniform(ks[1], (hidden,), jnp.float32, -bound, bound),
        "W_video": xavier_uniform(ks[2], (hidden, hidden)),
        "b_video": jax.random.uniform(ks[3], (hidden,), jnp.float32, -bound, bound),
        "W_v": xavier_uniform(ks[4], (hidden, hidden)),
        "W_g": xavier_uniform(ks[5], (hidden, hidden)),
        "W_h": xavier_uniform(ks[6], (hidden, hidden)),
    }


def agv_ref(audio, video, p):
    """Pure-JAX f32 reference of the PyTorch forward."""
    v_t = jax.nn.relu(video @ p["W_video"].T + p["b_video"])
    a_t = jax.nn.relu(audio @ p["W_audio"].T + p["b_audio"])
    content_v = v_t @ p["W_v"].T + a_t @ p["W_g"].T
    z_t = jnp.tanh(content_v) @ p["W_h"].T
    alpha = jax.nn.softmax(z_t, axis=-1)
    return alpha * video


if __name__ == "__main__":
    key = jax.random.PRNGKey(0)
    k_audio, k_video, k_param = jax.random.split(key, 3)

    B, T, H = 2, 8, 128  # hidden_size=128 is the module default
    audio = jax.random.normal(k_audio, (B, T, H), jnp.float32)
    video = jax.random.normal(k_video, (B, T, H), jnp.float32)
    params = init_params(k_param, H)

    prep = prepare_params(params)            # one-time weight prep (outside jit)
    out = agv_forward(audio, video, prep)
    out = jax.block_until_ready(out)

    ref = agv_ref(audio, video, params)
    assert out.shape == (B, T, H)
    # bf16 MXU operands + approx reciprocal -> tolerance loosened vs f32 reference.
    assert jnp.allclose(out, ref, atol=2e-2, rtol=2e-2), "mismatch vs. JAX reference"
    assert jnp.isfinite(out).all()

    print("KERNEL_OK")
</pallas_src>

<mosaic_0001>
module attributes {stable_mosaic.version = 11 : i64} {
  func.func @agv_kernel(%arg0: i32, %arg1: memref<16x128xbf16, #tpu.memory_space<vmem>>, %arg2: memref<16x128xf32, #tpu.memory_space<vmem>>, %arg3: memref<128x128xbf16, #tpu.memory_space<vmem>>, %arg4: memref<1x128xf32, #tpu.memory_space<vmem>>, %arg5: memref<128x128xbf16, #tpu.memory_space<vmem>>, %arg6: memref<1x128xf32, #tpu.memory_space<vmem>>, %arg7: memref<128x128xbf16, #tpu.memory_space<vmem>>, %arg8: memref<128x128xbf16, #tpu.memory_space<vmem>>, %arg9: memref<128x128xbf16, #tpu.memory_space<vmem>>, %arg10: memref<16x128xf32, #tpu.memory_space<vmem>>) attributes {dimension_semantics = [#tpu.dimension_semantics<parallel>], iteration_bounds = array<i64: 1>, scalar_prefetch = 0 : i64, scratch_operands = 0 : i64, tpu.core_type = #tpu.core_type<tc>, window_params = [{transform_indices = @transform_0, window_bounds = array<i64: 16, 128>}, {transform_indices = @transform_1, window_bounds = array<i64: 16, 128>}, {pipeline_mode = #tpu.pipeline_mode<synchronous>, transform_indices = @transform_2, window_bounds = array<i64: 128, 128>}, {pipeline_mode = #tpu.pipeline_mode<synchronous>, transform_indices = @transform_3, window_bounds = array<i64: 1, 128>}, {pipeline_mode = #tpu.pipeline_mode<synchronous>, transform_indices = @transform_4, window_bounds = array<i64: 128, 128>}, {pipeline_mode = #tpu.pipeline_mode<synchronous>, transform_indices = @transform_5, window_bounds = array<i64: 1, 128>}, {pipeline_mode = #tpu.pipeline_mode<synchronous>, transform_indices = @transform_6, window_bounds = array<i64: 128, 128>}, {pipeline_mode = #tpu.pipeline_mode<synchronous>, transform_indices = @transform_7, window_bounds = array<i64: 128, 128>}, {pipeline_mode = #tpu.pipeline_mode<synchronous>, transform_indices = @transform_8, window_bounds = array<i64: 128, 128>}, {transform_indices = @transform_9, window_bounds = array<i64: 16, 128>}]} {
    %c0 = arith.constant 0 : index
    %c0_0 = arith.constant 0 : index
    %0 = vector.load %arg1[%c0, %c0_0] : memref<16x128xbf16, #tpu.memory_space<vmem>>, vector<16x128xbf16>
    %c0_1 = arith.constant 0 : index
    %c0_2 = arith.constant 0 : index
    %1 = vector.load %arg2[%c0_1, %c0_2] : memref<16x128xf32, #tpu.memory_space<vmem>>, vector<16x128xf32>
    %2 = arith.truncf %1 : vector<16x128xf32> to vector<16x128xbf16>
    %c0_3 = arith.constant 0 : index
    %c0_4 = arith.constant 0 : index
    %3 = vector.load %arg3[%c0_3, %c0_4] : memref<128x128xbf16, #tpu.memory_space<vmem>>, vector<128x128xbf16>
    %cst = arith.constant dense<0.000000e+00> : vector<16x128xf32>
    %4 = tpu.matmul %0, %3, %cst {dimension_numbers = #tpu.dot_dimension_numbers<[1], [0], [0], [1], [0, 0, 1, 1], [], []>} : vector<16x128xbf16>, vector<128x128xbf16>, vector<16x128xf32> -> vector<16x128xf32>
    %c0_5 = arith.constant 0 : index
    %c0_6 = arith.constant 0 : index
    %5 = vector.load %arg4[%c0_5, %c0_6] : memref<1x128xf32, #tpu.memory_space<vmem>>, vector<1x128xf32>
    %6 = vector.broadcast %5 : vector<1x128xf32> to vector<16x128xf32>
    %7 = arith.addf %4, %6 : vector<16x128xf32>
    %cst_7 = arith.constant 0.000000e+00 : f32
    %8 = vector.broadcast %cst_7 : f32 to vector<16x128xf32>
    %9 = arith.maximumf %7, %8 : vector<16x128xf32>
    %c0_8 = arith.constant 0 : index
    %c0_9 = arith.constant 0 : index
    %10 = vector.load %arg5[%c0_8, %c0_9] : memref<128x128xbf16, #tpu.memory_space<vmem>>, vector<128x128xbf16>
    %cst_10 = arith.constant dense<0.000000e+00> : vector<16x128xf32>
    %11 = tpu.matmul %2, %10, %cst_10 {dimension_numbers = #tpu.dot_dimension_numbers<[1], [0], [0], [1], [0, 0, 1, 1], [], []>} : vector<16x128xbf16>, vector<128x128xbf16>, vector<16x128xf32> -> vector<16x128xf32>
    %c0_11 = arith.constant 0 : index
    %c0_12 = arith.constant 0 : index
    %12 = vector.load %arg6[%c0_11, %c0_12] : memref<1x128xf32, #tpu.memory_space<vmem>>, vector<1x128xf32>
    %13 = vector.broadcast %12 : vector<1x128xf32> to vector<16x128xf32>
    %14 = arith.addf %11, %13 : vector<16x128xf32>
    %cst_13 = arith.constant 0.000000e+00 : f32
    %15 = vector.broadcast %cst_13 : f32 to vector<16x128xf32>
    %16 = arith.maximumf %14, %15 : vector<16x128xf32>
    %17 = arith.truncf %16 : vector<16x128xf32> to vector<16x128xbf16>
    %c0_14 = arith.constant 0 : index
    %c0_15 = arith.constant 0 : index
    %18 = vector.load %arg8[%c0_14, %c0_15] : memref<128x128xbf16, #tpu.memory_space<vmem>>, vector<128x128xbf16>
    %cst_16 = arith.constant dense<0.000000e+00> : vector<16x128xf32>
    %19 = tpu.matmul %17, %18, %cst_16 {dimension_numbers = #tpu.dot_dimension_numbers<[1], [0], [0], [1], [0, 0, 1, 1], [], []>} : vector<16x128xbf16>, vector<128x128xbf16>, vector<16x128xf32> -> vector<16x128xf32>
    %20 = arith.truncf %9 : vector<16x128xf32> to vector<16x128xbf16>
    %c0_17 = arith.constant 0 : index
    %c0_18 = arith.constant 0 : index
    %21 = vector.load %arg7[%c0_17, %c0_18] : memref<128x128xbf16, #tpu.memory_space<vmem>>, vector<128x128xbf16>
    %cst_19 = arith.constant dense<0.000000e+00> : vector<16x128xf32>
    %22 = tpu.matmul %20, %21, %cst_19 {dimension_numbers = #tpu.dot_dimension_numbers<[1], [0], [0], [1], [0, 0, 1, 1], [], []>} : vector<16x128xbf16>, vector<128x128xbf16>, vector<16x128xf32> -> vector<16x128xf32>
    %23 = arith.addf %19, %22 : vector<16x128xf32>
    %24 = math.tanh %23 : vector<16x128xf32>
    %25 = arith.truncf %24 : vector<16x128xf32> to vector<16x128xbf16>
    %c0_20 = arith.constant 0 : index
    %c0_21 = arith.constant 0 : index
    %26 = vector.load %arg9[%c0_20, %c0_21] : memref<128x128xbf16, #tpu.memory_space<vmem>>, vector<128x128xbf16>
    %cst_22 = arith.constant dense<0.000000e+00> : vector<16x128xf32>
    %27 = tpu.matmul %25, %26, %cst_22 {dimension_numbers = #tpu.dot_dimension_numbers<[1], [0], [0], [1], [0, 0, 1, 1], [], []>} : vector<16x128xbf16>, vector<128x128xbf16>, vector<16x128xf32> -> vector<16x128xf32>
    %cst_23 = arith.constant dense<0xFF800000> : vector<16xf32>
    %28 = vector.multi_reduction <maximumf>, %27, %cst_23 [1] : vector<16x128xf32> to vector<16xf32>
    %29 = vector.shape_cast %28 : vector<16xf32> to vector<16x1xf32>
    %30 = vector.broadcast %29 : vector<16x1xf32> to vector<16x128xf32>
    %31 = arith.subf %27, %30 : vector<16x128xf32>
    %32 = math.exp %31 : vector<16x128xf32>
    %cst_24 = arith.constant dense<0.000000e+00> : vector<16xf32>
    %33 = vector.multi_reduction <add>, %32, %cst_24 [1] : vector<16x128xf32> to vector<16xf32>
    %34 = vector.shape_cast %33 : vector<16xf32> to vector<16x1xf32>
    %35 = tpu.reciprocal %34 {approx = true} : vector<16x1xf32> -> vector<16x1xf32>
    %36 = vector.broadcast %35 : vector<16x1xf32> to vector<16x128xf32>
    %37 = arith.mulf %32, %36 : vector<16x128xf32>
    %38 = arith.mulf %37, %1 : vector<16x128xf32>
    %c0_25 = arith.constant 0 : index
    %c0_26 = arith.constant 0 : index
    %39 = vector.load %arg10[%c0_25, %c0_26] : memref<16x128xf32, #tpu.memory_space<vmem>>, vector<16x128xf32>
    tpu.vector_store %arg10[%c0_25, %c0_26], %38 {strides = array<i32>} : memref<16x128xf32, #tpu.memory_space<vmem>>, vector<16x128xf32>,
    return
  }
  func.func @transform_0(%arg0: i32) -> (i32, i32) {
    %c0_i32 = arith.constant 0 : i32
    %c0_i32_0 = arith.constant 0 : i32
    return %arg0, %c0_i32 : i32, i32
  }
  func.func @transform_1(%arg0: i32) -> (i32, i32) {
    %c0_i32 = arith.constant 0 : i32
    %c0_i32_0 = arith.constant 0 : i32
    return %arg0, %c0_i32 : i32, i32
  }
  func.func @transform_2(%arg0: i32) -> (i32, i32) {
    %c0_i32 = arith.constant 0 : i32
    %c0_i32_0 = arith.constant 0 : i32
    %c0_i32_1 = arith.constant 0 : i32
    return %c0_i32, %c0_i32_0 : i32, i32
  }
  func.func @transform_3(%arg0: i32) -> (i32, i32) {
    %c0_i32 = arith.constant 0 : i32
    %c0_i32_0 = arith.constant 0 : i32
    %c0_i32_1 = arith.constant 0 : i32
    return %c0_i32, %c0_i32_0 : i32, i32
  }
  func.func @transform_4(%arg0: i32) -> (i32, i32) {
    %c0_i32 = arith.constant 0 : i32
    %c0_i32_0 = arith.constant 0 : i32
    %c0_i32_1 = arith.constant 0 : i32
    return %c0_i32, %c0_i32_0 : i32, i32
  }
  func.func @transform_5(%arg0: i32) -> (i32, i32) {
    %c0_i32 = arith.constant 0 : i32
    %c0_i32_0 = arith.constant 0 : i32
    %c0_i32_1 = arith.constant 0 : i32
    return %c0_i32, %c0_i32_0 : i32, i32
  }
  func.func @transform_6(%arg0: i32) -> (i32, i32) {
    %c0_i32 = arith.constant 0 : i32
    %c0_i32_0 = arith.constant 0 : i32
    %c0_i32_1 = arith.constant 0 : i32
    return %c0_i32, %c0_i32_0 : i32, i32
  }
  func.func @transform_7(%arg0: i32) -> (i32, i32) {
    %c0_i32 = arith.constant 0 : i32
    %c0_i32_0 = arith.constant 0 : i32
    %c0_i32_1 = arith.constant 0 : i32
    return %c0_i32, %c0_i32_0 : i32, i32
  }
  func.func @transform_8(%arg0: i32) -> (i32, i32) {
    %c0_i32 = arith.constant 0 : i32
    %c0_i32_0 = arith.constant 0 : i32
    %c0_i32_1 = arith.constant 0 : i32
    return %c0_i32, %c0_i32_0 : i32, i32
  }
  func.func @transform_9(%arg0: i32) -> (i32, i32) {
    %c0_i32 = arith.constant 0 : i32
    %c0_i32_0 = arith.constant 0 : i32
    return %arg0, %c0_i32 : i32, i32
  }
}

</mosaic_0001>

<llo_original>
// kernel: agv_forward.1
$region0: #{agv_forward.1}
  #allocation0 [shape = 'u32[]', space=smem, size = 0x4, offset = 0x4, fixed_abs, tag = 'smem constant byte address 0x4 - core index']
  #allocation1 [shape = 'u32[72,128]{1,0:T(1,128)}', space=vmem, size = 0x9000, scoped, tag = 'internal scratch']
  %s0 = inlined_call_operand.vmem [shape: bf16[16,128], index: 0, kind: input, shape index: {}]
  %s1 = inlined_call_operand.vmem [shape: f32[16,128], index: 1, kind: input, shape index: {}]
  %s2 = inlined_call_operand.hbm [shape: bf16[128,128], index: 2, kind: input, shape index: {}]
  %s3 = inlined_call_operand.vmem [shape: f32[1,128], index: 3, kind: input, shape index: {}]
  %s4 = inlined_call_operand.hbm [shape: bf16[128,128], index: 4, kind: input, shape index: {}]
  %s5 = inlined_call_operand.vmem [shape: f32[1,128], index: 5, kind: input, shape index: {}]
  %s6 = inlined_call_operand.hbm [shape: bf16[128,128], index: 6, kind: input, shape index: {}]
  %s7 = inlined_call_operand.hbm [shape: bf16[128,128], index: 7, kind: input, shape index: {}]
  %s8 = inlined_call_operand.hbm [shape: bf16[128,128], index: 8, kind: input, shape index: {}]
  %s9 = inlined_call_operand.hbm [shape: f32[16,128], index: 9, kind: output, shape index: {}]
  %s10 = sld [smem:[#allocation0]]
  $region66: #{agv_forward.1} parent=0
    _
  %s12 = ssub.s32 1, %s10
  %s13 = scalar_select 0, %s12, %s10
  $region1: #{agv_forward.1} parent=0
    #allocation2 [shape = 'u8[32768]{0}', space=vmem, size = 0x8000, scoped, tag = 'input window, operand 2, single buffered']
    #allocation3 [shape = 's32[1]{0}', space=sflag, size = 0x4, scoped, tag = 'scoped memory for agv_forward.1']
    #allocation4 [shape = 's32[1]{0}', space=sflag, size = 0x4, scoped, tag = 'scoped memory for agv_forward.1']
    #allocation5 [shape = 'u8[32768]{0}', space=vmem, size = 0x8000, scoped, tag = 'input window, operand 4, single buffered']
    #allocation6 [shape = 's32[1]{0}', space=sflag, size = 0x4, scoped, tag = 'scoped memory for agv_forward.1']
    #allocation7 [shape = 'u8[32768]{0}', space=vmem, size = 0x8000, scoped, tag = 'input window, operand 6, single buffered']
    #allocation8 [shape = 'u8[32768]{0}', space=vmem, size = 0x8000, scoped, tag = 'input window, operand 7, single buffered']
    #allocation9 [shape = 's32[1]{0}', space=sflag, size = 0x4, scoped, tag = 'scoped memory for agv_forward.1']
    #allocation10 [shape = 'u8[32768]{0}', space=vmem, size = 0x8000, scoped, tag = 'input window, operand 8, single buffered']
    #allocation11 [shape = 'u8[8192]{0}', space=vmem, size = 0x2000, scoped, tag = 'output window, operand 0, single buffered']
    %14 = vsyncpa [#allocation3], 0
    %15 = vsyncpa [#allocation6], 0
    %16 = vsyncpa [#allocation9], 0
    %17 = vsyncpa [#allocation4], 0
    // Predicated region
    $region2: #{agv_forward.1} parent=1 // pred_check
      _
    $region3: #{agv_forward.1} parent=1 // pred_check_branch
      %19 = sbr.rel (0) target = $region5
    $region4: #{agv_forward.1} parent=1 // pred_region
      _
    $region5: #{agv_forward.1} parent=1 // pred_fallthru
      _
    // Predicated region
    $region6: #{agv_forward.1} parent=1 // pred_check
      _
    $region7: #{agv_forward.1} parent=1 // pred_check_branch
      %21 = sbr.rel (0) target = $region9
    $region8: #{agv_forward.1} parent=1 // pred_region
      _
    $region9: #{agv_forward.1} parent=1 // pred_fallthru
      _
    // Predicated region
    $region10: #{agv_forward.1} parent=1 // pred_check
      _
    $region11: #{agv_forward.1} parent=1 // pred_check_branch
      %23 = sbr.rel (0) target = $region13
    $region12: #{agv_forward.1} parent=1 // pred_region
      %25 = vsyncadd [#allocation3], 0
      %s26 = sshll.u32 %s2, 4
      %s27 = int_to_ptr.hbm [resolvable:$true] %s26
      %s28 = sshll.u32 [#allocation2], 4
      %s29 = int_to_ptr.vmem [resolvable:$true] %s28
      %34 = dma.hbm_to_vmem [thread:$0]  %s27, 1024, %s29, [#allocation3], 64, 64, 4
    $region13: #{agv_forward.1} parent=1 // pred_fallthru
      _
    // Predicated region
    $region14: #{agv_forward.1} parent=1 // pred_check
      _
    $region15: #{agv_forward.1} parent=1 // pred_check_branch
      %36 = sbr.rel (0) target = $region17
    $region16: #{agv_forward.1} parent=1 // pred_region
      _
    $region17: #{agv_forward.1} parent=1 // pred_fallthru
      _
    // Predicated region
    $region18: #{agv_forward.1} parent=1 // pred_check
      _
    $region19: #{agv_forward.1} parent=1 // pred_check_branch
      %38 = sbr.rel (0) target = $region21
    $region20: #{agv_forward.1} parent=1 // pred_region
      %40 = vsyncadd [#allocation6], 0
      %s41 = sshll.u32 %s4, 4
      %s42 = int_to_ptr.hbm [resolvable:$true] %s41
      %s43 = sshll.u32 [#allocation5], 4
      %s44 = int_to_ptr.vmem [resolvable:$true] %s43
      %49 = dma.hbm_to_vmem [thread:$0]  %s42, 1024, %s44, [#allocation6], 64, 64, 4
    $region21: #{agv_forward.1} parent=1 // pred_fallthru
      _
    // Predicated region
    $region22: #{agv_forward.1} parent=1 // pred_check
      _
    $region23: #{agv_forward.1} parent=1 // pred_check_branch
      %51 = sbr.rel (0) target = $region25
    $region24: #{agv_forward.1} parent=1 // pred_region
      _
    $region25: #{agv_forward.1} parent=1 // pred_fallthru
      _
    // Predicated region
    $region26: #{agv_forward.1} parent=1 // pred_check
      _
    $region27: #{agv_forward.1} parent=1 // pred_check_branch
      %53 = sbr.rel (0) target = $region29
    $region28: #{agv_forward.1} parent=1 // pred_region
      %55 = vsyncadd [#allocation6], 0
      %s56 = sshll.u32 %s6, 4
      %s57 = int_to_ptr.hbm [resolvable:$true] %s56
      %s58 = sshll.u32 [#allocation7], 4
      %s59 = int_to_ptr.vmem [resolvable:$true] %s58
      %64 = dma.hbm_to_vmem [thread:$0]  %s57, 1024, %s59, [#allocation6], 64, 64, 4
    $region29: #{agv_forward.1} parent=1 // pred_fallthru
      _
    // Predicated region
    $region30: #{agv_forward.1} parent=1 // pred_check
      _
    $region31: #{agv_forward.1} parent=1 // pred_check_branch
      %66 = sbr.rel (0) target = $region33
    $region32: #{agv_forward.1} parent=1 // pred_region
      %68 = vsyncadd [#allocation9], 0
      %s69 = sshll.u32 %s7, 4
      %s70 = int_to_ptr.hbm [resolvable:$true] %s69
      %s71 = sshll.u32 [#allocation8], 4
      %s72 = int_to_ptr.vmem [resolvable:$true] %s71
      %77 = dma.hbm_to_vmem [thread:$0]  %s70, 1024, %s72, [#allocation9], 64, 64, 4
    $region33: #{agv_forward.1} parent=1 // pred_fallthru
      _
    // Predicated region
    $region34: #{agv_forward.1} parent=1 // pred_check
      _
    $region35: #{agv_forward.1} parent=1 // pred_check_branch
      %79 = sbr.rel (0) target = $region37
    $region36: #{agv_forward.1} parent=1 // pred_region
      %81 = vsyncadd [#allocation9], 0
      %s82 = sshll.u32 %s8, 4
      %s83 = int_to_ptr.hbm [resolvable:$true] %s82
      %s84 = sshll.u32 [#allocation10], 4
      %s85 = int_to_ptr.vmem [resolvable:$true] %s84
      %90 = dma.hbm_to_vmem [thread:$0]  %s83, 1024, %s85, [#allocation9], 64, 64, 4
    $region37: #{agv_forward.1} parent=1 // pred_fallthru
      _
    // Predicated region
    $region38: #{agv_forward.1} parent=1 // pred_check
      _
    $region39: #{agv_forward.1} parent=1 // pred_check_branch
      %92 = sbr.rel (0) target = $region41
    $region40: #{agv_forward.1} parent=1 // pred_region
      %94 = dma.done [#allocation3], 1024
    $region41: #{agv_forward.1} parent=1 // pred_fallthru
      _
    // Predicated region
    $region42: #{agv_forward.1} parent=1 // pred_check
      _
    $region43: #{agv_forward.1} parent=1 // pred_check_branch
      %96 = sbr.rel (0) target = $region45
    $region44: #{agv_forward.1} parent=1 // pred_region
      %98 = dma.done [#allocation6], 1024
    $region45: #{agv_forward.1} parent=1 // pred_fallthru
      _
    // Predicated region
    $region46: #{agv_forward.1} parent=1 // pred_check
      _
    $region47: #{agv_forward.1} parent=1 // pred_check_branch
      %100 = sbr.rel (0) target = $region49
    $region48: #{agv_forward.1} parent=1 // pred_region
      %102 = dma.done [#allocation6], 1024
    $region49: #{agv_forward.1} parent=1 // pred_fallthru
      _
    // Predicated region
    $region50: #{agv_forward.1} parent=1 // pred_check
      _
    $region51: #{agv_forward.1} parent=1 // pred_check_branch
      %104 = sbr.rel (0) target = $region53
    $region52: #{agv_forward.1} parent=1 // pred_region
      %106 = dma.done [#allocation9], 1024
    $region53: #{agv_forward.1} parent=1 // pred_fallthru
      _
    // Predicated region
    $region54: #{agv_forward.1} parent=1 // pred_check
      _
    $region55: #{agv_forward.1} parent=1 // pred_check_branch
      %108 = sbr.rel (0) target = $region57
    $region56: #{agv_forward.1} parent=1 // pred_region
      %110 = dma.done [#allocation9], 1024
    $region57: #{agv_forward.1} parent=1 // pred_fallthru
      _
    %v111 = vld [vmem:[%s0] sm:$0xf]
    %v112 = vld [vmem:[%s0 + $0x4] sm:$0xf]
    %v113 = vld [vmem:[%s1] sm:$0xff]
    %v114 = vld [vmem:[%s1 + $0x8] sm:$0xff]
    %v115 = vpack.c.bf16 %v114, %v113
    %v116 = vld [vmem:[#allocation2] sm:$0xf]
    %v117 = vld [vmem:[#allocation2 + $0x4] sm:$0xf]
    %v118 = vld [vmem:[#allocation2 + $0x8] sm:$0xf]
    %v119 = vld [vmem:[#allocation2 + $0xc] sm:$0xf]
    %v120 = vld [vmem:[#allocation2 + $0x10] sm:$0xf]
    %v121 = vld [vmem:[#allocation2 + $0x14] sm:$0xf]
    %v122 = vld [vmem:[#allocation2 + $0x18] sm:$0xf]
    %v123 = vld [vmem:[#allocation2 + $0x1c] sm:$0xf]
    %v124 = vld [vmem:[#allocation2 + $0x20] sm:$0xf]
    %v125 = vld [vmem:[#allocation2 + $0x24] sm:$0xf]
    %v126 = vld [vmem:[#allocation2 + $0x28] sm:$0xf]
    %v127 = vld [vmem:[#allocation2 + $0x2c] sm:$0xf]
    %v128 = vld [vmem:[#allocation2 + $0x30] sm:$0xf]
    %v129 = vld [vmem:[#allocation2 + $0x34] sm:$0xf]
    %v130 = vld [vmem:[#allocation2 + $0x38] sm:$0xf]
    %v131 = vld [vmem:[#allocation2 + $0x3c] sm:$0xf]
    %v132 = vld [vmem:[%s3] sm:$0x1]
    %v134 = vperm.slane %v132, 0
    %v138 = vunpack.c.l.b16 %v111
    %v139 = vunpack.c.l.b16 %v112
    %v140 = vpack.c.b16 %v139, %v138
    %v158 = vunpack.c.l.b16 %v116
    %v159 = vunpack.c.l.b16 %v117
    %v160 = vunpack.c.l.b16 %v118
    %v161 = vunpack.c.l.b16 %v119
    %v162 = vunpack.c.l.b16 %v120
    %v163 = vunpack.c.l.b16 %v121
    %v164 = vunpack.c.l.b16 %v122
    %v165 = vunpack.c.l.b16 %v123
    %v166 = vunpack.c.l.b16 %v124
    %v167 = vunpack.c.l.b16 %v125
    %v168 = vunpack.c.l.b16 %v126
    %v169 = vunpack.c.l.b16 %v127
    %v170 = vunpack.c.l.b16 %v128
    %v171 = vunpack.c.l.b16 %v129
    %v172 = vunpack.c.l.b16 %v130
    %v173 = vunpack.c.l.b16 %v131
    %v174 = vpack.c.b16 %v159, %v158
    %v175 = vpack.c.b16 %v161, %v160
    %v176 = vpack.c.b16 %v163, %v162
    %v177 = vpack.c.b16 %v165, %v164
    %v178 = vpack.c.b16 %v167, %v166
    %v179 = vpack.c.b16 %v169, %v168
    %v180 = vpack.c.b16 %v171, %v170
    %v181 = vpack.c.b16 %v173, %v172
    %190 = vmatpush.bf16.msra.mxu0 %v181
    %191 = vmatpush.bf16.msra.mxu0 %v180
    %192 = vmatpush.bf16.msra.mxu0 %v179
    %193 = vmatpush.bf16.msra.mxu0 %v178
    %194 = vmatpush.bf16.msra.mxu0 %v177
    %195 = vmatpush.bf16.msra.mxu0 %v176
    %196 = vmatpush.bf16.msra.mxu0 %v175
    %197 = vmatpush.bf16.msra.mxu0 %v174
    %198 = vmatmul.bf16.gmra.mxu0 %v140
    %v199 = vpop.f32.mrf.mxu0
    %v200 = vadd.f32 %v134, %v199
    %v201 = vpop.f32.mrf.mxu0
    %v202 = vadd.f32 %v134, %v201
    %203 = vdwg.mxu0
    %v204 = vmax.f32 %v200, 0.0
    %v205 = vmax.f32 %v202, 0.0
    %v206 = vld [vmem:[#allocation5] sm:$0xf]
    %v207 = vld [vmem:[#allocation5 + $0x4] sm:$0xf]
    %v208 = vld [vmem:[#allocation5 + $0x8] sm:$0xf]
    %v209 = vld [vmem:[#allocation5 + $0xc] sm:$0xf]
    %v210 = vld [vmem:[#allocation5 + $0x10] sm:$0xf]
    %v211 = vld [vmem:[#allocation5 + $0x14] sm:$0xf]
    %v212 = vld [vmem:[#allocation5 + $0x18] sm:$0xf]
    %v213 = vld [vmem:[#allocation5 + $0x1c] sm:$0xf]
    %v214 = vld [vmem:[#allocation5 + $0x20] sm:$0xf]
    %v215 = vld [vmem:[#allocation5 + $0x24] sm:$0xf]
    %v216 = vld [vmem:[#allocation5 + $0x28] sm:$0xf]
    %v217 = vld [vmem:[#allocation5 + $0x2c] sm:$0xf]
    %v218 = vld [vmem:[#allocation5 + $0x30] sm:$0xf]
    %v219 = vld [vmem:[#allocation5 + $0x34] sm:$0xf]
    %v220 = vld [vmem:[#allocation5 + $0x38] sm:$0xf]
    %v221 = vld [vmem:[#allocation5 + $0x3c] sm:$0xf]
    %v222 = vld [vmem:[%s5] sm:$0x1]
    %v224 = vperm.slane %v222, 0
    %v242 = vunpack.c.l.b16 %v206
    %v243 = vunpack.c.l.b16 %v207
    %v244 = vunpack.c.l.b16 %v208
    %v245 = vunpack.c.l.b16 %v209
    %v246 = vunpack.c.l.b16 %v210
    %v247 = vunpack.c.l.b16 %v211
    %v248 = vunpack.c.l.b16 %v212
    %v249 = vunpack.c.l.b16 %v213
    %v250 = vunpack.c.l.b16 %v214
    %v251 = vunpack.c.l.b16 %v215
    %v252 = vunpack.c.l.b16 %v216
    %v253 = vunpack.c.l.b16 %v217
    %v254 = vunpack.c.l.b16 %v218
    %v255 = vunpack.c.l.b16 %v219
    %v256 = vunpack.c.l.b16 %v220
    %v257 = vunpack.c.l.b16 %v221
    %v258 = vpack.c.b16 %v243, %v242
    %v259 = vpack.c.b16 %v245, %v244
    %v260 = vpack.c.b16 %v247, %v246
    %v261 = vpack.c.b16 %v249, %v248
    %v262 = vpack.c.b16 %v251, %v250
    %v263 = vpack.c.b16 %v253, %v252
    %v264 = vpack.c.b16 %v255, %v254
    %v265 = vpack.c.b16 %v257, %v256
    %274 = vmatpush.bf16.msra.mxu0 %v265
    %275 = vmatpush.bf16.msra.mxu0 %v264
    %276 = vmatpush.bf16.msra.mxu0 %v263
    %277 = vmatpush.bf16.msra.mxu0 %v262
    %278 = vmatpush.bf16.msra.mxu0 %v261
    %279 = vmatpush.bf16.msra.mxu0 %v260
    %280 = vmatpush.bf16.msra.mxu0 %v259
    %281 = vmatpush.bf16.msra.mxu0 %v258
    %282 = vmatmul.bf16.gmra.mxu0 %v115
    %v283 = vpop.f32.mrf.mxu0
    %v284 = vadd.f32 %v224, %v283
    %v285 = vpop.f32.mrf.mxu0
    %v286 = vadd.f32 %v224, %v285
    %287 = vdwg.mxu0
    %v288 = vmax.f32 %v284, 0.0
    %v289 = vmax.f32 %v286, 0.0
    %v290 = vpack.c.bf16 %v289, %v288
    %v291 = vld [vmem:[#allocation8] sm:$0xf]
    %v292 = vld [vmem:[#allocation8 + $0x4] sm:$0xf]
    %v293 = vld [vmem:[#allocation8 + $0x8] sm:$0xf]
    %v294 = vld [vmem:[#allocation8 + $0xc] sm:$0xf]
    %v295 = vld [vmem:[#allocation8 + $0x10] sm:$0xf]
    %v296 = vld [vmem:[#allocation8 + $0x14] sm:$0xf]
    %v297 = vld [vmem:[#allocation8 + $0x18] sm:$0xf]
    %v298 = vld [vmem:[#allocation8 + $0x1c] sm:$0xf]
    %v299 = vld [vmem:[#allocation8 + $0x20] sm:$0xf]
    %v300 = vld [vmem:[#allocation8 + $0x24] sm:$0xf]
    %v301 = vld [vmem:[#allocation8 + $0x28] sm:$0xf]
    %v302 = vld [vmem:[#allocation8 + $0x2c] sm:$0xf]
    %v303 = vld [vmem:[#allocation8 + $0x30] sm:$0xf]
    %v304 = vld [vmem:[#allocation8 + $0x34] sm:$0xf]
    %v305 = vld [vmem:[#allocation8 + $0x38] sm:$0xf]
    %v306 = vld [vmem:[#allocation8 + $0x3c] sm:$0xf]
    %v307 = vpack.c.bf16 %v205, %v204
    %v308 = vld [vmem:[#allocation7] sm:$0xf]
    %v309 = vld [vmem:[#allocation7 + $0x4] sm:$0xf]
    %v310 = vld [vmem:[#allocation7 + $0x8] sm:$0xf]
    %v311 = vld [vmem:[#allocation7 + $0xc] sm:$0xf]
    %v312 = vld [vmem:[#allocation7 + $0x10] sm:$0xf]
    %v313 = vld [vmem:[#allocation7 + $0x14] sm:$0xf]
    %v314 = vld [vmem:[#allocation7 + $0x18] sm:$0xf]
    %v315 = vld [vmem:[#allocation7 + $0x1c] sm:$0xf]
    %v316 = vld [vmem:[#allocation7 + $0x20] sm:$0xf]
    %v317 = vld [vmem:[#allocation7 + $0x24] sm:$0xf]
    %v318 = vld [vmem:[#allocation7 + $0x28] sm:$0xf]
    %v319 = vld [vmem:[#allocation7 + $0x2c] sm:$0xf]
    %v320 = vld [vmem:[#allocation7 + $0x30] sm:$0xf]
    %v321 = vld [vmem:[#allocation7 + $0x34] sm:$0xf]
    %v322 = vld [vmem:[#allocation7 + $0x38] sm:$0xf]
    %v323 = vld [vmem:[#allocation7 + $0x3c] sm:$0xf]
    %v340 = vunpack.c.l.b16 %v308
    %v341 = vunpack.c.l.b16 %v309
    %v342 = vunpack.c.l.b16 %v310
    %v343 = vunpack.c.l.b16 %v311
    %v344 = vunpack.c.l.b16 %v312
    %v345 = vunpack.c.l.b16 %v313
    %v346 = vunpack.c.l.b16 %v314
    %v347 = vunpack.c.l.b16 %v315
    %v348 = vunpack.c.l.b16 %v316
    %v349 = vunpack.c.l.b16 %v317
    %v350 = vunpack.c.l.b16 %v318
    %v351 = vunpack.c.l.b16 %v319
    %v352 = vunpack.c.l.b16 %v320
    %v353 = vunpack.c.l.b16 %v321
    %v354 = vunpack.c.l.b16 %v322
    %v355 = vunpack.c.l.b16 %v323
    %v356 = vpack.c.b16 %v341, %v340
    %v357 = vpack.c.b16 %v343, %v342
    %v358 = vpack.c.b16 %v345, %v344
    %v359 = vpack.c.b16 %v347, %v346
    %v360 = vpack.c.b16 %v349, %v348
    %v361 = vpack.c.b16 %v351, %v350
    %v362 = vpack.c.b16 %v353, %v352
    %v363 = vpack.c.b16 %v355, %v354
    %372 = vmatpush.bf16.msra.mxu0 %v363
    %373 = vmatpush.bf16.msra.mxu0 %v362
    %374 = vmatpush.bf16.msra.mxu0 %v361
    %375 = vmatpush.bf16.msra.mxu0 %v360
    %376 = vmatpush.bf16.msra.mxu0 %v359
    %377 = vmatpush.bf16.msra.mxu0 %v358
    %378 = vmatpush.bf16.msra.mxu0 %v357
    %379 = vmatpush.bf16.msra.mxu0 %v356
    %380 = vmatmul.bf16.gmra.mxu0 %v307
    %v381 = vpop.f32.mrf.mxu0
    %v382 = vadd.f32 0.0, %v381
    %v383 = vpop.f32.mrf.mxu0
    %v384 = vadd.f32 0.0, %v383
    %385 = vdwg.mxu0
    %v402 = vunpack.c.l.b16 %v291
    %v403 = vunpack.c.l.b16 %v292
    %v404 = vunpack.c.l.b16 %v293
    %v405 = vunpack.c.l.b16 %v294
    %v406 = vunpack.c.l.b16 %v295
    %v407 = vunpack.c.l.b16 %v296
    %v408 = vunpack.c.l.b16 %v297
    %v409 = vunpack.c.l.b16 %v298
    %v410 = vunpack.c.l.b16 %v299
    %v411 = vunpack.c.l.b16 %v300
    %v412 = vunpack.c.l.b16 %v301
    %v413 = vunpack.c.l.b16 %v302
    %v414 = vunpack.c.l.b16 %v303
    %v415 = vunpack.c.l.b16 %v304
    %v416 = vunpack.c.l.b16 %v305
    %v417 = vunpack.c.l.b16 %v306
    %v418 = vpack.c.b16 %v403, %v402
    %v419 = vpack.c.b16 %v405, %v404
    %v420 = vpack.c.b16 %v407, %v406
    %v421 = vpack.c.b16 %v409, %v408
    %v422 = vpack.c.b16 %v411, %v410
    %v423 = vpack.c.b16 %v413, %v412
    %v424 = vpack.c.b16 %v415, %v414
    %v425 = vpack.c.b16 %v417, %v416
    %434 = vmatpush.bf16.msra.mxu0 %v425
    %435 = vmatpush.bf16.msra.mxu0 %v424
    %436 = vmatpush.bf16.msra.mxu0 %v423
    %437 = vmatpush.bf16.msra.mxu0 %v422
    %438 = vmatpush.bf16.msra.mxu0 %v421
    %439 = vmatpush.bf16.msra.mxu0 %v420
    %440 = vmatpush.bf16.msra.mxu0 %v419
    %441 = vmatpush.bf16.msra.mxu0 %v418
    %442 = vmatmul.bf16.gmra.mxu0 %v290
    %v443 = vpop.f32.mrf.mxu0
    %v444 = vadd.f32 %v382, %v443
    %v445 = vpop.f32.mrf.mxu0
    %v446 = vadd.f32 %v384, %v445
    %447 = vdwg.mxu0
    %v448 = vtanh.pop %v444
    %v449 = vtanh.pop %v446
    %v450 = vpack.c.bf16 %v449, %v448
    %v451 = vld [vmem:[#allocation10] sm:$0xf]
    %v452 = vld [vmem:[#allocation10 + $0x4] sm:$0xf]
    %v453 = vld [vmem:[#allocation10 + $0x8] sm:$0xf]
    %v454 = vld [vmem:[#allocation10 + $0xc] sm:$0xf]
    %v455 = vld [vmem:[#allocation10 + $0x10] sm:$0xf]
    %v456 = vld [vmem:[#allocation10 + $0x14] sm:$0xf]
    %v457 = vld [vmem:[#allocation10 + $0x18] sm:$0xf]
    %v458 = vld [vmem:[#allocation10 + $0x1c] sm:$0xf]
    %v459 = vld [vmem:[#allocation10 + $0x20] sm:$0xf]
    %v460 = vld [vmem:[#allocation10 + $0x24] sm:$0xf]
    %v461 = vld [vmem:[#allocation10 + $0x28] sm:$0xf]
    %v462 = vld [vmem:[#allocation10 + $0x2c] sm:$0xf]
    %v463 = vld [vmem:[#allocation10 + $0x30] sm:$0xf]
    %v464 = vld [vmem:[#allocation10 + $0x34] sm:$0xf]
    %v465 = vld [vmem:[#allocation10 + $0x38] sm:$0xf]
    %v466 = vld [vmem:[#allocation10 + $0x3c] sm:$0xf]
    %v483 = vunpack.c.l.b16 %v451
    %v484 = vunpack.c.l.b16 %v452
    %v485 = vunpack.c.l.b16 %v453
    %v486 = vunpack.c.l.b16 %v454
    %v487 = vunpack.c.l.b16 %v455
    %v488 = vunpack.c.l.b16 %v456
    %v489 = vunpack.c.l.b16 %v457
    %v490 = vunpack.c.l.b16 %v458
    %v491 = vunpack.c.l.b16 %v459
    %v492 = vunpack.c.l.b16 %v460
    %v493 = vunpack.c.l.b16 %v461
    %v494 = vunpack.c.l.b16 %v462
    %v495 = vunpack.c.l.b16 %v463
    %v496 = vunpack.c.l.b16 %v464
    %v497 = vunpack.c.l.b16 %v465
    %v498 = vunpack.c.l.b16 %v466
    %v499 = vpack.c.b16 %v484, %v483
    %v500 = vpack.c.b16 %v486, %v485
    %v501 = vpack.c.b16 %v488, %v487
    %v502 = vpack.c.b16 %v490, %v489
    %v503 = vpack.c.b16 %v492, %v491
    %v504 = vpack.c.b16 %v494, %v493
    %v505 = vpack.c.b16 %v496, %v495
    %v506 = vpack.c.b16 %v498, %v497
    %515 = vmatpush.bf16.msra.mxu0 %v506
    %516 = vmatpush.bf16.msra.mxu0 %v505
    %517 = vmatpush.bf16.msra.mxu0 %v504
    %518 = vmatpush.bf16.msra.mxu0 %v503
    %519 = vmatpush.bf16.msra.mxu0 %v502
    %520 = vmatpush.bf16.msra.mxu0 %v501
    %521 = vmatpush.bf16.msra.mxu0 %v500
    %522 = vmatpush.bf16.msra.mxu0 %v499
    %523 = vmatmul.bf16.gmra.mxu0 %v450
    %v524 = vpop.f32.mrf.mxu0
    %v525 = vadd.f32 0.0, %v524
    %v526 = vpop.f32.mrf.mxu0
    %v527 = vadd.f32 0.0, %v526
    %528 = vdwg.mxu0
    %529 = vmax.xlane.f32.xlu0 %v525
    %v530 = vpop.xlane.xlu0 %529
    %531 = vmax.xlane.f32.xlu0 %v527
    %v532 = vpop.xlane.xlu0 %531
    %v533 = vsub.f32 %v525, %v530
    %v534 = vsub.f32 %v527, %v532
    %v535 = vmul.f32 %v533, 1.442695
    %v536 = vpow.pop %v535
    %v537 = vmul.f32 %v534, 1.442695
    %v538 = vpow.pop %v537
    %539 = vadd.xlane.f32.xlu0 %v536
    %v540 = vpop.xlane.xlu0 %539
    %541 = vadd.xlane.f32.xlu0 %v538
    %v542 = vpop.xlane.xlu0 %541
    %v543 = vrcp.pop %v540
    %v544 = vrcp.pop %v542
    %v545 = vmul.f32 %v536, %v543
    %v546 = vmul.f32 %v538, %v544
    %v547 = vmul.f32 %v545, %v113
    %v548 = vmul.f32 %v546, %v114
    %549 = vst [vmem:[#allocation11] sm:$0xff] %v547
    %550 = vst [vmem:[#allocation11 + $0x8] sm:$0xff] %v548
    // Predicated region
    $region58: #{agv_forward.1} parent=1 // pred_check
      _
    $region59: #{agv_forward.1} parent=1 // pred_check_branch
      %552 = sbr.rel (0) target = $region61
    $region60: #{agv_forward.1} parent=1 // pred_region
      %554 = vsyncadd [#allocation4], 0
      %s555 = sshll.u32 [#allocation11], 4
      %s556 = int_to_ptr.vmem [resolvable:$true] %s555
      %s557 = sshll.u32 %s9, 4
      %s558 = int_to_ptr.hbm [resolvable:$true] %s557
      %563 = dma.vmem_to_hbm [thread:$0]  %s556, 256, %s558, [#allocation4], 128, 128, 8
    $region61: #{agv_forward.1} parent=1 // pred_fallthru
      _
    // Predicated region
    $region62: #{agv_forward.1} parent=1 // pred_check
      _
    $region63: #{agv_forward.1} parent=1 // pred_check_branch
      %565 = sbr.rel (0) target = $region65
    $region64: #{agv_forward.1} parent=1 // pred_region
      %567 = dma.done [#allocation4], 256
    $region65: #{agv_forward.1} parent=1 // pred_fallthru
      _
    %568 = vsyncpa [#allocation3], 1
    %569 = vsyncpa [#allocation6], 1
    %570 = vsyncpa [#allocation9], 1
    %571 = vsyncpa [#allocation4], 1

</llo_original>
